<compile_context>
chip_gen: v7x
topology: tpu7x:2x2x1
jax: 0.10.0
libtpu: 0.0.40
codegen_flags: <defaults>
</compile_context>

<pallas_src>
import jax
import jax.numpy as jnp
from jax.experimental import pallas as pl
from jax.experimental.pallas import tpu as pltpu


def _dynamics_kernel(x_ref, wt_ref, o_ref):
    # Single MXU matmul per batch tile; f32 accumulation.
    o_ref[...] = jnp.dot(
        x_ref[...], wt_ref[...], preferred_element_type=jnp.float32
    ).astype(o_ref.dtype)


def _pick_batch_tile(batch):
    """Largest sublane-aligned tile that evenly divides `batch`.

    Falls back to the full batch (block == full array dim is always legal)
    when batch is small or not a multiple of 8.
    """
    for tm in (1024, 512, 256, 128, 64, 32, 16, 8):
        if batch % tm == 0:
            return tm
    return batch


def dynamics_forward(x, w_t, *, tm=None):
    """Forward pass of `dynamics`.

    x:   (batch, b) activations.
    w_t: (b, b) weight stored TRANSPOSED (i.e. w_t == W.T of the PyTorch
         nn.Linear weight), so the result x @ w_t == x @ W.T == Linear(x).
    """
    batch, b = x.shape
    assert w_t.shape == (b, b), "weight must be (b, b)"

    if tm is None:
        tm = _pick_batch_tile(batch)
    grid = (batch // tm,)

    itemsize = jnp.dtype(x.dtype).itemsize
    cost = pl.CostEstimate(
        flops=2 * batch * b * b,
        transcendentals=0,
        bytes_accessed=(batch * b + b * b + batch * b) * itemsize,
    )

    # VMEM budget (f32): resident weight b*b*4 + 2x double-buffered x tile
    # (2*tm*b*4) + 2x out tile.  Trivial at these sizes; if b grows into the
    # thousands, shrink tm (esp. on v7x's 64 MiB VMEM) or cast to bf16.
    return pl.pallas_call(
        _dynamics_kernel,
        out_shape=jax.ShapeDtypeStruct((batch, b), x.dtype),
        grid=grid,
        in_specs=[
            pl.BlockSpec((tm, b), lambda i: (i, 0)),   # x: tiled over batch
            pl.BlockSpec((b, b), lambda i: (0, 0)),    # W.T: VMEM-resident
        ],
        out_specs=pl.BlockSpec((tm, b), lambda i: (i, 0)),
        compiler_params=pltpu.CompilerParams(
            dimension_semantics=("parallel",),          # batch rows independent
        ),
        cost_estimate=cost,
    )(x, w_t)


def init_dynamics_params(key, b, init_scale):
    """Deterministic re-implementation of dynamics.__init__:
      W0 ~ Normal(0, 1/b);  (U, S, V) = svd(W0);  W = (U @ V.T) * init_scale.
    (torch.svd returns V, and U @ V.T == U @ Vh with jnp's svd.)

    Returns W.T so the forward pass is a plain x @ w_t matmul with no
    per-call transpose (transpose paid exactly once, here at init).
    """
    w0 = jax.random.normal(key, (b, b), dtype=jnp.float32) * (1.0 / b)
    u, _, vh = jnp.linalg.svd(w0, full_matrices=False)
    w = (u @ vh) * init_scale
    return jnp.asarray(w.T)


if __name__ == "__main__":
    key = jax.random.PRNGKey(0)
    k_w, k_x, k_w2, k_x2 = jax.random.split(key, 4)

    # --- small shape consistent with the module (hidden b = 32) -------------
    batch, b = 8, 32
    init_scale = 1.0

    w_t = init_dynamics_params(k_w, b, init_scale)          # parameter = W.T
    x = jax.random.normal(k_x, (batch, b), dtype=jnp.float32)

    y = dynamics_forward(x, w_t)
    jax.block_until_ready(y)

    y_ref = jnp.dot(x, w_t, precision=jax.lax.Precision.HIGHEST)
    assert y.shape == (batch, b)
    assert jnp.allclose(y, y_ref, atol=1e-5, rtol=1e-5)

    # --- larger, lane-dense case: exercises the tiled / pipelined path ------
    batch2, b2 = 2048, 256                                   # grid=(2,), tm=1024
    w_t2 = init_dynamics_params(k_w2, b2, init_scale)
    x2 = jax.random.normal(k_x2, (batch2, b2), dtype=jnp.float32)

    y2 = dynamics_forward(x2, w_t2)
    jax.block_until_ready(y2)

    y2_ref = jnp.dot(x2, w_t2, precision=jax.lax.Precision.HIGHEST)
    assert y2.shape == (batch2, b2)
    assert jnp.allclose(y2, y2_ref, atol=1e-4, rtol=1e-4)

    print("KERNEL_OK")
</pallas_src>

<mosaic_0001>
module attributes {stable_mosaic.version = 11 : i64} {
  func.func @_dynamics_kernel(%arg0: i32, %arg1: memref<8x32xf32, #tpu.memory_space<vmem>>, %arg2: memref<32x32xf32, #tpu.memory_space<vmem>>, %arg3: memref<8x32xf32, #tpu.memory_space<vmem>>) attributes {dimension_semantics = [#tpu.dimension_semantics<parallel>], iteration_bounds = array<i64: 1>, scalar_prefetch = 0 : i64, scratch_operands = 0 : i64, tpu.core_type = #tpu.core_type<tc>, window_params = [{transform_indices = @transform_0, window_bounds = array<i64: 8, 32>}, {pipeline_mode = #tpu.pipeline_mode<synchronous>, transform_indices = @transform_1, window_bounds = array<i64: 32, 32>}, {transform_indices = @transform_2, window_bounds = array<i64: 8, 32>}]} {
    %c0 = arith.constant 0 : index
    %c0_0 = arith.constant 0 : index
    %0 = vector.load %arg1[%c0, %c0_0] : memref<8x32xf32, #tpu.memory_space<vmem>>, vector<8x32xf32>
    %c0_1 = arith.constant 0 : index
    %c0_2 = arith.constant 0 : index
    %1 = vector.load %arg2[%c0_1, %c0_2] : memref<32x32xf32, #tpu.memory_space<vmem>>, vector<32x32xf32>
    %cst = arith.constant dense<0.000000e+00> : vector<8x32xf32>
    %2 = tpu.matmul %0, %1, %cst {dimension_numbers = #tpu.dot_dimension_numbers<[1], [0], [0], [1], [0, 0, 1, 1], [], []>} : vector<8x32xf32>, vector<32x32xf32>, vector<8x32xf32> -> vector<8x32xf32>
    %c0_3 = arith.constant 0 : index
    %c0_4 = arith.constant 0 : index
    %3 = vector.load %arg3[%c0_3, %c0_4] : memref<8x32xf32, #tpu.memory_space<vmem>>, vector<8x32xf32>
    tpu.vector_store %arg3[%c0_3, %c0_4], %2 {strides = array<i32>} : memref<8x32xf32, #tpu.memory_space<vmem>>, vector<8x32xf32>,
    return
  }
  func.func @transform_0(%arg0: i32) -> (i32, i32) {
    %c0_i32 = arith.constant 0 : i32
    %c0_i32_0 = arith.constant 0 : i32
    return %arg0, %c0_i32 : i32, i32
  }
  func.func @transform_1(%arg0: i32) -> (i32, i32) {
    %c0_i32 = arith.constant 0 : i32
    %c0_i32_0 = arith.constant 0 : i32
    %c0_i32_1 = arith.constant 0 : i32
    return %c0_i32, %c0_i32_0 : i32, i32
  }
  func.func @transform_2(%arg0: i32) -> (i32, i32) {
    %c0_i32 = arith.constant 0 : i32
    %c0_i32_0 = arith.constant 0 : i32
    return %arg0, %c0_i32 : i32, i32
  }
}

</mosaic_0001>

<llo_original>
// kernel: tpu_custom_call.1
$region0: #{tpu_custom_call.1}
  #allocation0 [shape = 'u32[]', space=smem, size = 0x4, offset = 0x4, fixed_abs, tag = 'smem constant byte address 0x4 - core index']
  #allocation1 [shape = 'u32[144,128]{1,0:T(1,128)}', space=vmem, size = 0x12000, scoped, tag = 'internal scratch']
  %s0 = inlined_call_operand.hbm [shape: f32[8,32], index: 0, kind: input, shape index: {}]
  %s1 = inlined_call_operand.hbm [shape: f32[32,32], index: 1, kind: input, shape index: {}]
  %s2 = inlined_call_operand.hbm [shape: f32[8,32], index: 2, kind: output, shape index: {}]
  %s3 = sld [smem:[#allocation0]]
  $region26: #{tpu_custom_call.1} parent=0
    _
  %s5 = ssub.s32 1, %s3
  %s6 = scalar_select 0, %s5, %s3
  $region1: #{tpu_custom_call.1} parent=0
    #allocation2 [shape = 'u8[4096]{0}', space=vmem, size = 0x1000, scoped, tag = 'input window, operand 0, single buffered']
    #allocation3 [shape = 's32[1]{0}', space=sflag, size = 0x4, scoped, tag = 'scoped memory for tpu_custom_call.1']
    #allocation4 [shape = 's32[1]{0}', space=sflag, size = 0x4, scoped, tag = 'scoped memory for tpu_custom_call.1']
    #allocation5 [shape = 'u8[16384]{0}', space=vmem, size = 0x4000, scoped, tag = 'input window, operand 1, single buffered']
    #allocation6 [shape = 's32[1]{0}', space=sflag, size = 0x4, scoped, tag = 'scoped memory for tpu_custom_call.1']
    #allocation7 [shape = 'u8[4096]{0}', space=vmem, size = 0x1000, scoped, tag = 'output window, operand 0, single buffered']
    %7 = vsyncpa [#allocation3], 0
    %8 = vsyncpa [#allocation6], 0
    %9 = vsyncpa [#allocation4], 0
    // Predicated region
    $region2: #{tpu_custom_call.1} parent=1 // pred_check
      _
    $region3: #{tpu_custom_call.1} parent=1 // pred_check_branch
      %11 = sbr.rel (0) target = $region5
    $region4: #{tpu_custom_call.1} parent=1 // pred_region
      %s13 = ssub.s32 128, 128
      %14 = vsyncadd [#allocation3], %s13
      %s16 = sshll.u32 [#allocation2], 4
      %s17 = int_to_ptr.vmem [resolvable:$true] %s16
      %19 = dma.hbm_to_vmem [thread:$0]  %s0, 128, %s17, [#allocation3]
    $region5: #{tpu_custom_call.1} parent=1 // pred_fallthru
      _
    // Predicated region
    $region6: #{tpu_custom_call.1} parent=1 // pred_check
      _
    $region7: #{tpu_custom_call.1} parent=1 // pred_check_branch
      %21 = sbr.rel (0) target = $region9
    $region8: #{tpu_custom_call.1} parent=1 // pred_region
      %s23 = ssub.s32 512, 512
      %24 = vsyncadd [#allocation6], %s23
      %s25 = sshll.u32 [#allocation5], 4
      %s26 = int_to_ptr.vmem [resolvable:$true] %s25
      %31 = dma.hbm_to_vmem [thread:$0]  %s1, 512, %s26, [#allocation6], 128, 128, 8
    $region9: #{tpu_custom_call.1} parent=1 // pred_fallthru
      _
    // Predicated region
    $region10: #{tpu_custom_call.1} parent=1 // pred_check
      _
    $region11: #{tpu_custom_call.1} parent=1 // pred_check_branch
      %33 = sbr.rel (0) target = $region13
    $region12: #{tpu_custom_call.1} parent=1 // pred_region
      %34 = dma.done [#allocation3], 128
    $region13: #{tpu_custom_call.1} parent=1 // pred_fallthru
      _
    // Predicated region
    $region14: #{tpu_custom_call.1} parent=1 // pred_check
      _
    $region15: #{tpu_custom_call.1} parent=1 // pred_check_branch
      %36 = sbr.rel (0) target = $region17
    $region16: #{tpu_custom_call.1} parent=1 // pred_region
      %37 = dma.done [#allocation6], 512
    $region17: #{tpu_custom_call.1} parent=1 // pred_fallthru
      _
    %v38 = vld [vmem:[#allocation2] sm:$0xff]
    %v39 = vld [vmem:[#allocation5] sm:$0xff]
    %v40 = vld [vmem:[#allocation5 + $0x8] sm:$0xff]
    %v41 = vld [vmem:[#allocation5 + $0x10] sm:$0xff]
    %v42 = vld [vmem:[#allocation5 + $0x18] sm:$0xff]
    %vm43 = vcmask 261120
    %v45 = vsel %vm43, %v38, 0
    %47 = vmatprep.subr.mxu0 0.0
    %48 = vmatpush1.msra.mxu0 %v39
    %49 = vmatprep.subr.mxu0 0.0
    %50 = vmatpush1.msra.mxu0 %v40
    %51 = vmatprep.subr.mxu0 0.0
    %52 = vmatpush1.msra.mxu0 %v41
    %53 = vmatprep.subr.mxu0 0.0
    %54 = vmatpush1.msra.mxu0 %v42
    %55 = vmatprep.subr.mxu0 0.0
    %56 = vmatpush1.msra.mxu0 0.0
    %57 = vmatprep.subr.mxu0 0.0
    %58 = vmatpush1.msra.mxu0 0.0
    %59 = vmatprep.subr.mxu0 0.0
    %60 = vmatpush1.msra.mxu0 0.0
    %61 = vmatprep.subr.mxu0 0.0
    %62 = vmatpush1.msra.mxu0 0.0
    %63 = vmatprep.subr.mxu0 0.0
    %64 = vmatpush1.msra.mxu0 0.0
    %65 = vmatprep.subr.mxu0 0.0
    %66 = vmatpush1.msra.mxu0 0.0
    %67 = vmatprep.subr.mxu0 0.0
    %68 = vmatpush1.msra.mxu0 0.0
    %69 = vmatprep.subr.mxu0 0.0
    %70 = vmatpush1.msra.mxu0 0.0
    %71 = vmatprep.subr.mxu0 0.0
    %72 = vmatpush1.msra.mxu0 0.0
    %73 = vmatprep.subr.mxu0 0.0
    %74 = vmatpush1.msra.mxu0 0.0
    %75 = vmatprep.subr.mxu0 0.0
    %76 = vmatpush1.msra.mxu0 0.0
    %77 = vmatprep.subr.mxu0 0.0
    %78 = vmatpush1.msra.mxu0 0.0
    %79 = vmatprep.subr.mxu0 0.0
    %80 = vmatpush1.msra.mxu0 0.0
    %81 = vmatprep.subr.mxu0 0.0
    %82 = vmatpush1.msra.mxu0 0.0
    %83 = vmatprep.subr.mxu0 0.0
    %84 = vmatpush1.msra.mxu0 0.0
    %85 = vmatprep.subr.mxu0 0.0
    %86 = vmatpush1.msra.mxu0 0.0
    %87 = vmatprep.subr.mxu0 0.0
    %88 = vmatpush1.msra.mxu0 0.0
    %89 = vmatprep.subr.mxu0 0.0
    %90 = vmatpush1.msra.mxu0 0.0
    %91 = vmatprep.subr.mxu0 0.0
    %92 = vmatpush1.msra.mxu0 0.0
    %93 = vmatprep.subr.mxu0 0.0
    %94 = vmatpush1.msra.mxu0 0.0
    %95 = vmatprep.subr.mxu0 0.0
    %96 = vmatpush1.msra.mxu0 0.0
    %97 = vmatprep.subr.mxu0 0.0
    %98 = vmatpush1.msra.mxu0 0.0
    %99 = vmatprep.subr.mxu0 0.0
    %100 = vmatpush1.msra.mxu0 0.0
    %101 = vmatprep.subr.mxu0 0.0
    %102 = vmatpush1.msra.mxu0 0.0
    %103 = vmatprep.subr.mxu0 0.0
    %104 = vmatpush1.msra.mxu0 0.0
    %105 = vmatprep.subr.mxu0 0.0
    %106 = vmatpush1.msra.mxu0 0.0
    %107 = vmatprep.subr.mxu0 0.0
    %108 = vmatpush1.msra.mxu0 0.0
    %109 = vmatprep.subr.mxu0 0.0
    %110 = vmatpush1.msra.mxu0 0.0
    %111 = vmatprep.mubr.f32.mxu0 0.0
    %112 = vmatmul.mubr.f32.gmra.mrb[0].mxu0 %v45
    %v113 = vpop.f32.mrb[0].mxu0
    %v114 = vadd.f32 0.0, %v113
    %v115 = vpop.f32.mrb[0].mxu0
    %116 = vdwg.mxu0
    %117 = vst.msk [vmem:[#allocation7] sm:$0xff] %vm43, %v114
    // Predicated region
    $region18: #{tpu_custom_call.1} parent=1 // pred_check
      _
    $region19: #{tpu_custom_call.1} parent=1 // pred_check_branch
      %119 = sbr.rel (0) target = $region21
    $region20: #{tpu_custom_call.1} parent=1 // pred_region
      %s121 = ssub.s32 128, 128
      %122 = vsyncadd [#allocation4], %s121
      %s124 = sshll.u32 [#allocation7], 4
      %s125 = int_to_ptr.vmem [resolvable:$true] %s124
      %127 = dma.vmem_to_hbm [thread:$0]  %s125, 128, %s2, [#allocation4]
    $region21: #{tpu_custom_call.1} parent=1 // pred_fallthru
      _
    // Predicated region
    $region22: #{tpu_custom_call.1} parent=1 // pred_check
      _
    $region23: #{tpu_custom_call.1} parent=1 // pred_check_branch
      %129 = sbr.rel (0) target = $region25
    $region24: #{tpu_custom_call.1} parent=1 // pred_region
      %130 = dma.done [#allocation4], 128
    $region25: #{tpu_custom_call.1} parent=1 // pred_fallthru
      _
    %131 = vsyncpa [#allocation3], 1
    %132 = vsyncpa [#allocation6], 1
    %133 = vsyncpa [#allocation4], 1

</llo_original>
